<compile_context>
chip_gen: v6e
topology: v6e:2x2x1
jax: 0.10.0
libtpu: 0.0.40
codegen_flags: <defaults>
</compile_context>

<pallas_src>
import math

import jax
import jax.numpy as jnp
from jax.experimental import pallas as pl
from jax.experimental.pallas import tpu as pltpu


def _pbe_kernel(x_ref, omega_ref, shift_ref, w_ref, b_ref, o_ref):
    """Fused embedding + Linear on a packed, lane-dense tile.

    x_ref:     (TM, K)      packed coordinates: per point [x | x] in one slot
    omega_ref: (1, K)       per-lane angular frequency (0 on padded lanes)
    shift_ref: (1, K)       0 on cos lanes, -pi/2 on sin lanes
    w_ref:     (K, OUT_L)   bf16 block-diagonal kron(I_r, [Wc; Ws])
    b_ref:     (1, OUT_L)   bias + exact ones-block contribution
    o_ref:     (TM, OUT_L)  packed output tile (f32)
    """
    phase = omega_ref[...] * x_ref[...] + shift_ref[...]
    trig = jnp.cos(phase).astype(jnp.bfloat16)      # one EUP pass gives [cos | sin]
    acc = jnp.dot(trig, w_ref[...], preferred_element_type=jnp.float32)
    o_ref[...] = (acc + b_ref[...]).astype(o_ref.dtype)


def _next_pow2(v):
    p = 1
    while p < v:
        p *= 2
    return p


def _num_tensorcores():
    """v7x has 2 TensorCores sharing the 'parallel' grid axis; v5e/v6e have 1."""
    try:
        kind = jax.devices()[0].device_kind.lower()
    except Exception:
        return 1
    return 2 if ("v7" in kind or "tpu7" in kind) else 1


def _choose_tile(packed_rows, k, out_l, r, max_tile_points, min_steps, vmem_budget):
    """Tile size in packed rows: multiple of 8, as large as possible under the VMEM
    budget (double-buffered blocks), but small enough that large inputs keep at least
    `min_steps` grid steps for pipelining / megacore split."""

    def vmem_bytes(t):
        # double-buffered x/out blocks (f32) + double-buffered constant blocks
        return 2 * t * (k + out_l) * 4 + 2 * (k * out_l * 2 + 2 * k * 4 + out_l * 4)

    cap = max(8, (max_tile_points // r) // 8 * 8)
    tm_p = min(cap, pl.cdiv(packed_rows, 8) * 8)
    while tm_p > 8 and vmem_bytes(tm_p) > vmem_budget:
        tm_p = max(8, (tm_p // 2) // 8 * 8)
    while tm_p > 8 and pl.cdiv(packed_rows, tm_p) < min_steps:
        tm_p = max(8, (tm_p // 2) // 8 * 8)
    return tm_p


def periodic_boundary_embedding(x, periods, weight, bias, *,
                                max_tile_points=16384,
                                vmem_budget_bytes=12 * 1024 * 1024,
                                weight_budget_bytes=2 * 1024 * 1024):
    """x: (..., D) float. periods: (D,). weight: (3D, OUT) [= torch Linear weight.T].
    bias: (OUT,). Returns (..., OUT) float32."""
    d = x.shape[-1]
    out_dim = weight.shape[-1]
    assert weight.shape[0] == 3 * d

    lead_shape = x.shape[:-1]
    n = int(math.prod(lead_shape)) if lead_shape else 1
    x2 = jnp.asarray(x, jnp.float32).reshape(n, d)

    omega = (2.0 * jnp.pi / jnp.asarray(periods, jnp.float32)).reshape(d)
    w = jnp.asarray(weight, jnp.float32)
    w_ones, w_cos, w_sin = w[:d], w[d:2 * d], w[2 * d:]
    # ones(N, D) @ W_ones == column-sum of W_ones; fold it exactly (f32) into the bias.
    b_eff = jnp.asarray(bias, jnp.float32) + jnp.sum(w_ones, axis=0)

    # ---- packing geometry: r points per 128-lane row, slot = 2*d_pad lanes/point ----
    if d <= 64:
        r = 128 // (2 * _next_pow2(d))                 # points per packed row (pow2)
        # Cap the r-fold kron weight replication so replicated weights stay small
        # in VMEM (matters for large OUT, especially on v7x's 64 MiB VMEM).
        while r > 1 and 128 * r * out_dim * 2 > weight_budget_bytes:
            r //= 2
        d_pad = 64 // r
        k = 128
    else:
        r = 1
        d_pad = ((d + 63) // 64) * 64                  # 2*d_pad is a multiple of 128
        k = 2 * d_pad
    out_l = r * out_dim

    # ---- host-side constant construction (one-time, O(weights)) --------------------
    if d_pad != d:                                      # zero-pad coords / weights
        x2 = jnp.pad(x2, ((0, 0), (0, d_pad - d)))
        omega = jnp.pad(omega, (0, d_pad - d))
        w_cos = jnp.pad(w_cos, ((0, d_pad - d), (0, 0)))
        w_sin = jnp.pad(w_sin, ((0, d_pad - d), (0, 0)))

    # Per-point lane layout: [omega*x | omega*x - pi/2]  ->  one cos yields [cos | sin].
    omega_pt = jnp.concatenate([omega, omega])                              # (2*d_pad,)
    shift_pt = jnp.concatenate([jnp.zeros((d_pad,), jnp.float32),
                                jnp.full((d_pad,), -0.5 * jnp.pi, jnp.float32)])
    omega_row = jnp.tile(omega_pt, r).reshape(1, k)
    shift_row = jnp.tile(shift_pt, r).reshape(1, k)
    w_pt = jnp.concatenate([w_cos, w_sin], axis=0)                          # (2*d_pad, OUT)
    w_big = jnp.kron(jnp.eye(r, dtype=jnp.float32), w_pt).astype(jnp.bfloat16)
    b_big = jnp.tile(b_eff, r).reshape(1, out_l)

    # Pad N only to the packing unit (8 sublanes x r points); the last grid block may
    # be partial and Pallas masks its store.  Padded points are zeros, so they only
    # hit zero weight columns of other points (no NaN/garbage contamination).
    unit = 8 * r
    n_pad = pl.cdiv(n, unit) * unit
    if n_pad != n:
        x2 = jnp.pad(x2, ((0, n_pad - n), (0, 0)))
    x_dup = jnp.concatenate([x2, x2], axis=-1)                              # (n_pad, 2*d_pad)
    x_packed = x_dup.reshape(n_pad // r, k)                                 # row-major view

    packed_rows = n_pad // r
    min_steps = 4 * _num_tensorcores()
    tm_p = _choose_tile(packed_rows, k, out_l, r, max_tile_points, min_steps,
                        vmem_budget_bytes)

    out = pl.pallas_call(
        _pbe_kernel,
        out_shape=jax.ShapeDtypeStruct((packed_rows, out_l), jnp.float32),
        grid_spec=pltpu.PrefetchScalarGridSpec(
            num_scalar_prefetch=0,
            grid=(pl.cdiv(packed_rows, tm_p),),
            in_specs=[
                pl.BlockSpec((tm_p, k), lambda i: (i, 0)),      # packed coordinates
                pl.BlockSpec((1, k), lambda i: (0, 0)),         # omega (replicated)
                pl.BlockSpec((1, k), lambda i: (0, 0)),         # cos/sin lane shift
                pl.BlockSpec((k, out_l), lambda i: (0, 0)),     # block-diag [Wc; Ws] bf16
                pl.BlockSpec((1, out_l), lambda i: (0, 0)),     # bias (+ ones fold)
            ],
            out_specs=pl.BlockSpec((tm_p, out_l), lambda i: (i, 0)),
        ),
        compiler_params=pltpu.CompilerParams(
            dimension_semantics=("parallel",)),
    )(x_packed, omega_row, shift_row, w_big, b_big)

    out = out.reshape(n_pad, out_dim)        # contiguous row-major view: free
    if n_pad != n:
        out = out[:n]
    return out.reshape(*lead_shape, out_dim)


def _reference(x, periods, weight, bias):
    d = x.shape[-1]
    omega = (2.0 * jnp.pi / jnp.asarray(periods, jnp.float32)).reshape(1, d)
    phase = omega * x
    phi = jnp.concatenate([jnp.ones_like(x), jnp.cos(phase), jnp.sin(phase)], axis=-1)
    return jnp.dot(phi, weight, precision=jax.lax.Precision.HIGHEST) + bias


if __name__ == "__main__":
    # Mirrors PeriodicBoundaryEmbedding(input_dimension=4,
    #   periods={0: 1.0, 1: 2.0, 2: 0.5, 3: 1.5}, output_dimension=32)
    input_dim = 4
    output_dim = 32
    periods = jnp.array([1.0, 2.0, 0.5, 1.5], jnp.float32)

    key = jax.random.PRNGKey(0)
    kx, kw, kb = jax.random.split(key, 3)

    # Deterministic Linear(3*D, OUT) parameters (torch-style uniform init range),
    # stored as (in_features, out_features) = torch weight transposed.
    fan_in = 3 * input_dim
    bound = 1.0 / math.sqrt(fan_in)
    weight = jax.random.uniform(kw, (fan_in, output_dim), jnp.float32, -bound, bound)
    bias = jax.random.uniform(kb, (output_dim,), jnp.float32, -bound, bound)

    # Batch of 2, 128 collocation points each, 4 coordinates (feature-last).
    x = jax.random.uniform(kx, (2, 128, input_dim), jnp.float32, -3.0, 3.0)

    out = periodic_boundary_embedding(x, periods, weight, bias)
    out = jax.block_until_ready(out)

    ref = _reference(x, periods, weight, bias)
    assert out.shape == (2, 128, output_dim), out.shape
    # The kernel pins the matmul to an explicit bf16-multiply / f32-accumulate single
    # MXU pass (the fast path on all TPU generations); tolerance is sized for bf16
    # product rounding over 8 trig terms.  A layout/indexing bug would be off by
    # O(0.1 - 1), far above this threshold.
    max_err = float(jnp.max(jnp.abs(out - ref)))
    assert jnp.allclose(out, ref, rtol=2e-2, atol=2e-2), max_err

    print("KERNEL_OK")
</pallas_src>

<mosaic_0001>
module attributes {stable_mosaic.version = 11 : i64} {
  func.func @_pbe_kernel(%arg0: i32, %arg1: memref<8x128xf32, #tpu.memory_space<vmem>>, %arg2: memref<1x128xf32, #tpu.memory_space<vmem>>, %arg3: memref<1x128xf32, #tpu.memory_space<vmem>>, %arg4: memref<128x512xbf16, #tpu.memory_space<vmem>>, %arg5: memref<1x512xf32, #tpu.memory_space<vmem>>, %arg6: memref<8x512xf32, #tpu.memory_space<vmem>>) attributes {dimension_semantics = [#tpu.dimension_semantics<parallel>], iteration_bounds = array<i64: 2>, scalar_prefetch = 0 : i64, scratch_operands = 0 : i64, tpu.core_type = #tpu.core_type<tc>, window_params = [{transform_indices = @transform_0, window_bounds = array<i64: 8, 128>}, {pipeline_mode = #tpu.pipeline_mode<synchronous>, transform_indices = @transform_1, window_bounds = array<i64: 1, 128>}, {pipeline_mode = #tpu.pipeline_mode<synchronous>, transform_indices = @transform_2, window_bounds = array<i64: 1, 128>}, {pipeline_mode = #tpu.pipeline_mode<synchronous>, transform_indices = @transform_3, window_bounds = array<i64: 128, 512>}, {pipeline_mode = #tpu.pipeline_mode<synchronous>, transform_indices = @transform_4, window_bounds = array<i64: 1, 512>}, {transform_indices = @transform_5, window_bounds = array<i64: 8, 512>}]} {
    %c0 = arith.constant 0 : index
    %c0_0 = arith.constant 0 : index
    %0 = vector.load %arg2[%c0, %c0_0] : memref<1x128xf32, #tpu.memory_space<vmem>>, vector<1x128xf32>
    %c0_1 = arith.constant 0 : index
    %c0_2 = arith.constant 0 : index
    %1 = vector.load %arg1[%c0_1, %c0_2] : memref<8x128xf32, #tpu.memory_space<vmem>>, vector<8x128xf32>
    %2 = vector.broadcast %0 : vector<1x128xf32> to vector<8x128xf32>
    %3 = arith.mulf %2, %1 : vector<8x128xf32>
    %c0_3 = arith.constant 0 : index
    %c0_4 = arith.constant 0 : index
    %4 = vector.load %arg3[%c0_3, %c0_4] : memref<1x128xf32, #tpu.memory_space<vmem>>, vector<1x128xf32>
    %5 = vector.broadcast %4 : vector<1x128xf32> to vector<8x128xf32>
    %6 = arith.addf %3, %5 : vector<8x128xf32>
    %7 = math.cos %6 : vector<8x128xf32>
    %8 = arith.truncf %7 : vector<8x128xf32> to vector<8x128xbf16>
    %c0_5 = arith.constant 0 : index
    %c0_6 = arith.constant 0 : index
    %9 = vector.load %arg4[%c0_5, %c0_6] : memref<128x512xbf16, #tpu.memory_space<vmem>>, vector<128x512xbf16>
    %cst = arith.constant dense<0.000000e+00> : vector<8x512xf32>
    %10 = tpu.matmul %8, %9, %cst {dimension_numbers = #tpu.dot_dimension_numbers<[1], [0], [0], [1], [0, 0, 1, 1], [], []>} : vector<8x128xbf16>, vector<128x512xbf16>, vector<8x512xf32> -> vector<8x512xf32>
    %c0_7 = arith.constant 0 : index
    %c0_8 = arith.constant 0 : index
    %11 = vector.load %arg5[%c0_7, %c0_8] : memref<1x512xf32, #tpu.memory_space<vmem>>, vector<1x512xf32>
    %12 = vector.broadcast %11 : vector<1x512xf32> to vector<8x512xf32>
    %13 = arith.addf %10, %12 : vector<8x512xf32>
    %c0_9 = arith.constant 0 : index
    %c0_10 = arith.constant 0 : index
    %14 = vector.load %arg6[%c0_9, %c0_10] : memref<8x512xf32, #tpu.memory_space<vmem>>, vector<8x512xf32>
    tpu.vector_store %arg6[%c0_9, %c0_10], %13 {strides = array<i32>} : memref<8x512xf32, #tpu.memory_space<vmem>>, vector<8x512xf32>,
    return
  }
  func.func @transform_0(%arg0: i32) -> (i32, i32) {
    %c0_i32 = arith.constant 0 : i32
    %c0_i32_0 = arith.constant 0 : i32
    return %arg0, %c0_i32 : i32, i32
  }
  func.func @transform_1(%arg0: i32) -> (i32, i32) {
    %c0_i32 = arith.constant 0 : i32
    %c0_i32_0 = arith.constant 0 : i32
    %c0_i32_1 = arith.constant 0 : i32
    return %c0_i32, %c0_i32_0 : i32, i32
  }
  func.func @transform_2(%arg0: i32) -> (i32, i32) {
    %c0_i32 = arith.constant 0 : i32
    %c0_i32_0 = arith.constant 0 : i32
    %c0_i32_1 = arith.constant 0 : i32
    return %c0_i32, %c0_i32_0 : i32, i32
  }
  func.func @transform_3(%arg0: i32) -> (i32, i32) {
    %c0_i32 = arith.constant 0 : i32
    %c0_i32_0 = arith.constant 0 : i32
    %c0_i32_1 = arith.constant 0 : i32
    return %c0_i32, %c0_i32_0 : i32, i32
  }
  func.func @transform_4(%arg0: i32) -> (i32, i32) {
    %c0_i32 = arith.constant 0 : i32
    %c0_i32_0 = arith.constant 0 : i32
    %c0_i32_1 = arith.constant 0 : i32
    return %c0_i32, %c0_i32_0 : i32, i32
  }
  func.func @transform_5(%arg0: i32) -> (i32, i32) {
    %c0_i32 = arith.constant 0 : i32
    %c0_i32_0 = arith.constant 0 : i32
    return %arg0, %c0_i32 : i32, i32
  }
}

</mosaic_0001>

<llo_original>
// kernel: tpu_custom_call.1
$region0: #{tpu_custom_call.1}
  #allocation0 [shape = 'u32[]', space=smem, size = 0x4, offset = 0x4, fixed_abs, tag = 'smem constant byte address 0x4 - core index']
  #allocation1 [shape = 'u32[144,128]{1,0:T(1,128)}', space=vmem, size = 0x12000, scoped, tag = 'internal scratch']
  %s0 = inlined_call_operand.hbm [shape: f32[16,128], index: 0, kind: input, shape index: {}]
  %s1 = inlined_call_operand.vmem [shape: f32[1,128], index: 1, kind: input, shape index: {}]
  %s2 = inlined_call_operand.vmem [shape: f32[1,128], index: 2, kind: input, shape index: {}]
  %s3 = inlined_call_operand.hbm [shape: bf16[128,512], index: 3, kind: input, shape index: {}]
  %s4 = inlined_call_operand.vmem [shape: f32[1,512], index: 4, kind: input, shape index: {}]
  %s5 = inlined_call_operand.hbm [shape: f32[16,512], index: 5, kind: output, shape index: {}]
  %s6 = sld [smem:[#allocation0]]
  $region61: #{tpu_custom_call.1} parent=0
    _
  %s8 = ssub.s32 1, %s6
  %s9 = scalar_select 0, %s8, %s6
  $region1: #{tpu_custom_call.1} parent=0
    #allocation2 [shape = 'u8[8192]{0}', space=vmem, size = 0x2000, scoped, tag = 'input window, operand 0']
    #allocation3 [shape = 's32[2]{0}', space=sflag, size = 0x8, scoped, tag = 'scoped memory for tpu_custom_call.1']
    #allocation4 [shape = 's32[2]{0}', space=sflag, size = 0x8, scoped, tag = 'scoped memory for tpu_custom_call.1']
    #allocation5 [shape = 'u8[131072]{0}', space=vmem, size = 0x20000, scoped, tag = 'input window, operand 3, single buffered']
    #allocation6 [shape = 's32[1]{0}', space=sflag, size = 0x4, scoped, tag = 'scoped memory for tpu_custom_call.1']
    #allocation7 [shape = 'u8[32768]{0}', space=vmem, size = 0x8000, scoped, tag = 'output window, operand 0']
    %10 = vsyncpa [#allocation3], 0
    %s11 = scalar_lea.sflag [#allocation3], 1
    %12 = vsyncpa %s11, 0
    %13 = vsyncpa [#allocation6], 0
    %14 = vsyncpa [#allocation4], 0
    %s15 = scalar_lea.sflag [#allocation4], 1
    %16 = vsyncpa %s15, 0
    loop: start=0, step=1, limit=4
    $region2: #{tpu_custom_call.1} parent=1 // loop_pre_header
      _
    $region3: #{tpu_custom_call.1} parent=1 // loop_header
      %s18 = sphi 0, %s22
      %p19 = scmp.ge.s32.totalorder %s18, 4
      %s28 = sphi 0, %s30
      %s31 = sphi 0, %s28
      %s32 = sphi 0, %s31
      %s48 = sphi 0, %s32
      %s52 = sphi 0, %s52
      %s54 = sphi 0, %s52
      %s55 = sphi 0, %s54
      %s69 = sphi 0, %s55
      %s73 = sphi 0, %s73
      %s75 = sphi 0, %s73
      %s76 = sphi 0, %s75
      %s90 = sphi 0, %s76
      %s94 = sphi 0, %s94
      %s96 = sphi 0, %s94
      %s97 = sphi 0, %s96
      %s111 = sphi 0, %s97
      %s115 = sphi 0, %s115
      %s117 = sphi 0, %s115
      %s118 = sphi 0, %s117
      %s132 = sphi 0, %s118
      %s138 = sphi 0, %s140
      %s141 = sphi 0, %s138
      %s142 = sphi 0, %s141
      %s158 = sphi 0, %s142
    $region4: #{tpu_custom_call.1} parent=1 // loop_header_branch
      %21 = sbr.rel (%p19) target = $region8
    $region5: #{tpu_custom_call.1} parent=1 // loop_body
      %s23 = ssub.s32 %s18, 1
      %s24 = ssub.s32 %s18, 2
      %s25 = sadd.s32 %s18, 1
      %s26 = ssub.s32 %s18, %s25
      %p27 = scmp.eq.s32.totalorder %s26, 0
      %s29 = sadd.s32 %s28, 1
      %s30 = scalar_select %p27, %s28, %s29
      %p33 = pneg %p27
      %p34 = scmp.eq.s32.totalorder %s18, 1
      %p35 = por %p33, %p34
      %p36 = scmp.ne.s32.totalorder %s28, %s31
      %p37 = scmp.eq.s32.totalorder %s18, 0
      %p38 = por %p36, %p37
      %p39 = scmp.ne.s32.totalorder %s28, %s31
      %p40 = scmp.eq.s32.totalorder %s23, 1
      %p41 = por %p39, %p40
      %p42 = scmp.ne.s32.totalorder %s31, %s32
      %p43 = scmp.eq.s32.totalorder %s23, 0
      %p44 = por %p42, %p43
      %p45 = scmp.ne.s32.totalorder %s31, %s32
      %p46 = scmp.eq.s32.totalorder %s24, 1
      %p47 = por %p45, %p46
      %p49 = scmp.ne.s32.totalorder %s32, %s48
      %p50 = scmp.eq.s32.totalorder %s24, 0
      %p51 = por %p49, %p50
      %s53 = sadd.s32 %s52, 1
      %p56 = scmp.eq.s32.totalorder %s18, 1
      %p57 = scmp.ne.s32.totalorder %s52, %s54
      %p58 = scmp.eq.s32.totalorder %s18, 0
      %p59 = por %p57, %p58
      %p60 = scmp.ne.s32.totalorder %s52, %s54
      %p61 = scmp.eq.s32.totalorder %s23, 1
      %p62 = por %p60, %p61
      %p63 = scmp.ne.s32.totalorder %s54, %s55
      %p64 = scmp.eq.s32.totalorder %s23, 0
      %p65 = por %p63, %p64
      %p66 = scmp.ne.s32.totalorder %s54, %s55
      %p67 = scmp.eq.s32.totalorder %s24, 1
      %p68 = por %p66, %p67
      %p70 = scmp.ne.s32.totalorder %s55, %s69
      %p71 = scmp.eq.s32.totalorder %s24, 0
      %p72 = por %p70, %p71
      %s74 = sadd.s32 %s73, 1
      %p77 = scmp.eq.s32.totalorder %s18, 1
      %p78 = scmp.ne.s32.totalorder %s73, %s75
      %p79 = scmp.eq.s32.totalorder %s18, 0
      %p80 = por %p78, %p79
      %p81 = scmp.ne.s32.totalorder %s73, %s75
      %p82 = scmp.eq.s32.totalorder %s23, 1
      %p83 = por %p81, %p82
      %p84 = scmp.ne.s32.totalorder %s75, %s76
      %p85 = scmp.eq.s32.totalorder %s23, 0
      %p86 = por %p84, %p85
      %p87 = scmp.ne.s32.totalorder %s75, %s76
      %p88 = scmp.eq.s32.totalorder %s24, 1
      %p89 = por %p87, %p88
      %p91 = scmp.ne.s32.totalorder %s76, %s90
      %p92 = scmp.eq.s32.totalorder %s24, 0
      %p93 = por %p91, %p92
      %s95 = sadd.s32 %s94, 1
      %p98 = scmp.eq.s32.totalorder %s18, 1
      %p99 = scmp.ne.s32.totalorder %s94, %s96
      %p100 = scmp.eq.s32.totalorder %s18, 0
      %p101 = por %p99, %p100
      %p102 = scmp.ne.s32.totalorder %s94, %s96
      %p103 = scmp.eq.s32.totalorder %s23, 1
      %p104 = por %p102, %p103
      %p105 = scmp.ne.s32.totalorder %s96, %s97
      %p106 = scmp.eq.s32.totalorder %s23, 0
      %p107 = por %p105, %p106
      %p108 = scmp.ne.s32.totalorder %s96, %s97
      %p109 = scmp.eq.s32.totalorder %s24, 1
      %p110 = por %p108, %p109
      %p112 = scmp.ne.s32.totalorder %s97, %s111
      %p113 = scmp.eq.s32.totalorder %s24, 0
      %p114 = por %p112, %p113
      %s116 = sadd.s32 %s115, 1
      %p119 = scmp.eq.s32.totalorder %s18, 1
      %p120 = scmp.ne.s32.totalorder %s115, %s117
      %p121 = scmp.eq.s32.totalorder %s18, 0
      %p122 = por %p120, %p121
      %p123 = scmp.ne.s32.totalorder %s115, %s117
      %p124 = scmp.eq.s32.totalorder %s23, 1
      %p125 = por %p123, %p124
      %p126 = scmp.ne.s32.totalorder %s117, %s118
      %p127 = scmp.eq.s32.totalorder %s23, 0
      %p128 = por %p126, %p127
      %p129 = scmp.ne.s32.totalorder %s117, %s118
      %p130 = scmp.eq.s32.totalorder %s24, 1
      %p131 = por %p129, %p130
      %p133 = scmp.ne.s32.totalorder %s118, %s132
      %p134 = scmp.eq.s32.totalorder %s24, 0
      %p135 = por %p133, %p134
      %s136 = ssub.s32 %s18, %s25
      %p137 = scmp.eq.s32.totalorder %s136, 0
      %s139 = sadd.s32 %s138, 1
      %s140 = scalar_select %p137, %s138, %s139
      %p143 = pneg %p137
      %p144 = scmp.eq.s32.totalorder %s18, 1
      %p145 = por %p143, %p144
      %p146 = scmp.ne.s32.totalorder %s138, %s141
      %p147 = scmp.eq.s32.totalorder %s18, 0
      %p148 = por %p146, %p147
      %p149 = scmp.ne.s32.totalorder %s138, %s141
      %p150 = scmp.eq.s32.totalorder %s23, 1
      %p151 = por %p149, %p150
      %p152 = scmp.ne.s32.totalorder %s141, %s142
      %p153 = scmp.eq.s32.totalorder %s23, 0
      %p154 = por %p152, %p153
      %p155 = scmp.ne.s32.totalorder %s141, %s142
      %p156 = scmp.eq.s32.totalorder %s24, 1
      %p157 = por %p155, %p156
      %p159 = scmp.ne.s32.totalorder %s142, %s158
      %p160 = scmp.eq.s32.totalorder %s24, 0
      %p161 = por %p159, %p160
      %p162 = scmp.le.s32.totalorder 1, %s18
      %p163 = scmp.lt.s32.totalorder %s18, 3
      %p164 = pnand %p162, %p163
      %p165 = pneg %p164
      // Predicated region
      $region9: #{tpu_custom_call.1} parent=5 // pred_check
        _
      $region10: #{tpu_custom_call.1} parent=5 // pred_check_branch
        %167 = sbr.rel (%p164) target = $region12
      $region11: #{tpu_custom_call.1} parent=5 // pred_region
        %s168 = ssub.s32 %s18, 1
        // Predicated region
        $region13: #{tpu_custom_call.1} parent=11 // pred_check
          %p169 = pneg %p65
        $region14: #{tpu_custom_call.1} parent=11 // pred_check_branch
          %171 = sbr.rel (%p169) target = $region16
        $region15: #{tpu_custom_call.1} parent=11 // pred_region
          _
        $region16: #{tpu_custom_call.1} parent=11 // pred_fallthru
          _
        // Predicated region
        $region17: #{tpu_custom_call.1} parent=11 // pred_check
          %p172 = pneg %p86
        $region18: #{tpu_custom_call.1} parent=11 // pred_check_branch
          %174 = sbr.rel (%p172) target = $region20
        $region19: #{tpu_custom_call.1} parent=11 // pred_region
          _
        $region20: #{tpu_custom_call.1} parent=11 // pred_fallthru
          _
        // Predicated region
        $region21: #{tpu_custom_call.1} parent=11 // pred_check
          %p175 = pneg %p107
        $region22: #{tpu_custom_call.1} parent=11 // pred_check_branch
          %177 = sbr.rel (%p175) target = $region24
        $region23: #{tpu_custom_call.1} parent=11 // pred_region
          %s179 = ssub.s32 4096, 4096
          %180 = vsyncadd [#allocation6], %s179
          %s181 = sshll.u32 [#allocation5], 4
          %s182 = int_to_ptr.vmem [resolvable:$true] %s181
          %187 = dma.hbm_to_vmem [thread:$0]  %s3, 4096, %s182, [#allocation6], 256, 256, 16
        $region24: #{tpu_custom_call.1} parent=11 // pred_fallthru
          _
        // Predicated region
        $region25: #{tpu_custom_call.1} parent=11 // pred_check
          %p188 = pneg %p128
        $region26: #{tpu_custom_call.1} parent=11 // pred_check_branch
          %190 = sbr.rel (%p188) target = $region28
        $region27: #{tpu_custom_call.1} parent=11 // pred_region
          _
        $region28: #{tpu_custom_call.1} parent=11 // pred_fallthru
          _
      $region12: #{tpu_custom_call.1} parent=5 // pred_fallthru
        _
      %p191 = scmp.lt.s32.totalorder %s18, 2
      // Predicated region
      $region29: #{tpu_custom_call.1} parent=5 // pred_check
        %p192 = pneg %p191
      $region30: #{tpu_custom_call.1} parent=5 // pred_check_branch
        %194 = sbr.rel (%p192) target = $region32
      $region31: #{tpu_custom_call.1} parent=5 // pred_region
        // Predicated region
        $region33: #{tpu_custom_call.1} parent=31 // pred_check
          %p195 = pneg %p38
        $region34: #{tpu_custom_call.1} parent=31 // pred_check_branch
          %197 = sbr.rel (%p195) target = $region36
        $region35: #{tpu_custom_call.1} parent=31 // pred_region
          %s198 = sand.u32 %s28, 1
          %s199 = scalar_lea.sflag [#allocation3], %s198
          %s200 = sand.u32 %s28, 1
          %s201 = smul.addr %s200, 8
          %s202 = scalar_lea.vmem [#allocation2], %s201
          %s204 = ssub.s32 128, 128
          %205 = vsyncadd %s199, %s204
          %s206 = smul.addr %s18, 128
          %s207 = scalar_lea.hbm %s0, %s206
          %s209 = sshll.u32 %s202, 4
          %s210 = int_to_ptr.vmem [resolvable:$true] %s209
          %212 = dma.hbm_to_vmem [thread:$0]  %s207, 128, %s210, %s199
        $region36: #{tpu_custom_call.1} parent=31 // pred_fallthru
          _
      $region32: #{tpu_custom_call.1} parent=5 // pred_fallthru
        _
      %p213 = scmp.le.s32.totalorder 1, %s18
      %p214 = scmp.lt.s32.totalorder %s18, 3
      %p215 = pnand %p213, %p214
      %p216 = pneg %p215
      // Predicated region
      $region37: #{tpu_custom_call.1} parent=5 // pred_check
        _
      $region38: #{tpu_custom_call.1} parent=5 // pred_check_branch
        %218 = sbr.rel (%p215) target = $region40
      $region39: #{tpu_custom_call.1} parent=5 // pred_region
        %s219 = ssub.s32 %s18, 1
        %s220 = sand.u32 %s31, 1
        %s221 = scalar_lea.sflag [#allocation3], %s220
        %s222 = sand.u32 %s31, 1
        %s223 = smul.addr %s222, 8
        %s224 = scalar_lea.vmem [#allocation2], %s223
        // Predicated region
        $region41: #{tpu_custom_call.1} parent=39 // pred_check
          %p225 = pneg %p44
        $region42: #{tpu_custom_call.1} parent=39 // pred_check_branch
          %227 = sbr.rel (%p225) target = $region44
        $region43: #{tpu_custom_call.1} parent=39 // pred_region
          %228 = dma.done %s221, 128
        $region44: #{tpu_custom_call.1} parent=39 // pred_fallthru
          _
        // Predicated region
        $region45: #{tpu_custom_call.1} parent=39 // pred_check
          %p229 = pneg %p107
        $region46: #{tpu_custom_call.1} parent=39 // pred_check_branch
          %231 = sbr.rel (%p229) target = $region48
        $region47: #{tpu_custom_call.1} parent=39 // pred_region
          %232 = dma.done [#allocation6], 4096
        $region48: #{tpu_custom_call.1} parent=39 // pred_fallthru
          _
        %s233 = sand.u32 %s31, 1
        %s234 = scalar_lea.sflag [#allocation3], %s233
        %s235 = sand.u32 %s31, 1
        %s236 = smul.addr %s235, 8
        %s237 = scalar_lea.vmem [#allocation2], %s236
        %p238 = pneg %p44
        %p239 = pneg %p41
        %p240 = pneg %p65
        %p241 = pneg %p62
        %p242 = pneg %p86
        %p243 = pneg %p83
        %p244 = pneg %p107
        %p245 = pneg %p104
        %p246 = pneg %p128
        %p247 = pneg %p125
        %p248 = pneg %p154
        %p249 = pneg %p151
        %s250 = sand.u32 %s141, 1
        %s251 = scalar_lea.sflag [#allocation4], %s250
        %s252 = sand.u32 %s141, 1
        %s253 = smul.addr %s252, 32
        %s254 = scalar_lea.vmem [#allocation7], %s253
        %v256 = vld [vmem:[%s1] sm:$0x1]
        %v257 = vld [vmem:[%s224] sm:$0xff]
        %v259 = vlaneseq
        %v260 = vshrl.u32 %v259, 7
        %v261 = vsub.s32 0, %v260
        %v262 = vrot.slane %v256, %v261
        %v264 = vmul.f32 %v262, %v257
        %v265 = vld [vmem:[%s2] sm:$0x1]
        %v267 = vlaneseq
        %v268 = vshrl.u32 %v267, 7
        %v269 = vsub.s32 0, %v268
        %v270 = vrot.slane %v265, %v269
        %v272 = vadd.f32 %v264, %v270
        %v273 = vand.u32 2147483647, %v272
        %vm274 = vcmp.le.f32.partialorder %v273, 0.7853982
        %vm275 = vcmp.lt.s32.totalorder %v272, 0
        %v276 = vand.u32 %v272, 2139095040
        %v277 = vshrl.u32 %v276, 23
        %v278 = vsub.s32 %v277, 127
        %v279 = vand.u32 2147483647, %v272
        %v280 = vand.u32 %v279, 8388607
        %v281 = vor.u32 %v280, 8388608
        %v282 = vsub.s32 0, %v281
        %v283 = vadd.s32 %v278, 1
        %vm284 = vcmp.gt.s32.totalorder %v283, 0
        %v285 = vsel %vm284, %v283, 0
        %v286 = vshrl.u32 %v285, 5
        %v287 = vand.u32 %v285, 31
        %v288 = vsub.s32 32, %v287
        %v289 = vshrl.u32 683565275, %v288
        %v290 = vshll.u32 683565275, %v287
        %v291 = vshrl.u32 2475754826, %v288
        %v292 = vor.u32 %v290, %v291
        %v293 = vshll.u32 2475754826, %v287
        %v294 = vshrl.u32 2131351028, %v288
        %v295 = vor.u32 %v293, %v294
        %v296 = vshll.u32 2131351028, %v287
        %v297 = vshrl.u32 2102212464, %v288
        %v298 = vor.u32 %v296, %v297
        %v299 = vshll.u32 2102212464, %v287
        %v300 = vshrl.u32 920167782, %v288
        %v301 = vor.u32 %v299, %v300
        %v302 = vshll.u32 920167782, %v287
        %v303 = vshrl.u32 1326507024, %v288
        %v304 = vor.u32 %v302, %v303
        %vm305 = vcmp.lt.s32.totalorder %v286, 1
        %vm306 = vcmp.lt.s32.totalorder %v286, 2
        %vm307 = vcmp.lt.s32.totalorder %v286, 3
        %vm308 = vcmp.lt.s32.totalorder %v286, 4
        %v309 = vsel %vm305, %v289, %v292
        %v310 = vsel %vm308, %v298, 2102212464
        %v311 = vsel %vm307, %v295, %v310
        %v312 = vsel %vm306, %v309, %v311
        %v313 = vsel %vm305, %v292, %v295
        %v314 = vsel %vm308, %v301, 920167782
        %v315 = vsel %vm307, %v298, %v314
        %v316 = vsel %vm306, %v313, %v315
        %v317 = vsel %vm305, %v295, %v298
        %v318 = vsel %vm308, %v304, 1326507024
        %v319 = vsel %vm307, %v301, %v318
        %v320 = vsel %vm306, %v317, %v319
        %v321 = vshll.u32 %v281, 8
        %v322 = vmul.u32.u64.compose %v321, %v320
        %v323 = vextract.low.u32 %v322
        %v324 = vextract.high.u32 %v322
        %v325 = vmul.u32.u64.compose %v321, %v316
        %v326 = vextract.low.u32 %v325
        %v327 = vextract.high.u32 %v325
        %v328 = vmul.u32 %v321, %v312
        %v329 = vadd.s32 %v324, %v326
        %vm330 = vc.u32 %v324, %v326
        %v331 = vadd.s32 %v327, 1
        %v332 = vsel %vm330, %v331, %v327
        %v333 = vadd.s32 %v328, %v332
        %v334 = vadd.s32 %v333, 536870912
        %v335 = vshrl.u32 %v334, 30
        %v336 = vshll.u32 %v335, 30
        %v337 = vsub.s32 %v333, %v336
        %vm338 = vcmp.lt.s32.totalorder %v337, 0
        %v339 = vsub.s32 0, %v337
        %v340 = vsel %vm338, %v339, %v337
        %v341 = vclz %v340
        %v342 = vsub.s32 %v341, 2
        %vm343 = vcmp.gt.s32.totalorder 0, %v342
        %v344 = vsel %vm343, 0, %v342
        %v345 = vsub.s32 32, %v344
        %v346 = vshll.u32 %v337, %v344
        %v347 = vshrl.u32 %v329, %v345
        %v348 = vor.u32 %v346, %v347
        %v349 = vsub.s32 4294967266, %v344
        %v350 = vadd.s32 %v349, 127
        %v351 = vshll.u32 %v350, 23
        %v352 = vor.u32 4788187, %v351
        %v353 = vand.u32 2147483647, %v352
        %v355 = vcvt.s32.f32 %v348
        %v356 = vmul.f32 %v355, %v353
        %v357 = vxor.u32 %v356, 2147483648
        %v358 = vsel %vm275, %v357, %v356
        %v359 = vsub.s32 4, %v335
        %v360 = vsel %vm275, %v359, %v335
        %v361 = vsel %vm274, %v272, %v358
        %v362 = vsel %vm274, 0, %v360
        %v363 = vcosq.f32.pop %v361
        %v364 = vsinq.f32.pop %v361
        %vm365 = vweird.f32 %v272
        %v366 = vand.u32 %v362, 3
        %vm367 = vcmp.lt.s32.totalorder %v366, 2
        %vm368 = vcmp.eq.s32.totalorder %v366, 0
        %v369 = vxor.u32 %v364, 2147483648
        %v370 = vsel %vm368, %v363, %v369
        %vm371 = vcmp.eq.s32.totalorder %v366, 2
        %v372 = vxor.u32 %v363, 2147483648
        %v373 = vsel %vm371, %v372, %v364
        %v374 = vsel %vm367, %v370, %v373
        %v375 = vsel %vm365, nan, %v374
        %v376 = vpack.c.bf16 %v375, %v375
        %v377 = vld [vmem:[#allocation5] sm:$0xff]
        %v378 = vld [vmem:[#allocation5 + $0x8] sm:$0xff]
        %v379 = vld [vmem:[#allocation5 + $0x10] sm:$0xff]
        %v380 = vld [vmem:[#allocation5 + $0x18] sm:$0xff]
        %v381 = vld [vmem:[#allocation5 + $0x20] sm:$0xff]
        %v382 = vld [vmem:[#allocation5 + $0x28] sm:$0xff]
        %v383 = vld [vmem:[#allocation5 + $0x30] sm:$0xff]
        %v384 = vld [vmem:[#allocation5 + $0x38] sm:$0xff]
        %v385 = vld [vmem:[#allocation5 + $0x40] sm:$0xff]
        %v386 = vld [vmem:[#allocation5 + $0x48] sm:$0xff]
        %v387 = vld [vmem:[#allocation5 + $0x50] sm:$0xff]
        %v388 = vld [vmem:[#allocation5 + $0x58] sm:$0xff]
        %v389 = vld [vmem:[#allocation5 + $0x60] sm:$0xff]
        %v390 = vld [vmem:[#allocation5 + $0x68] sm:$0xff]
        %v391 = vld [vmem:[#allocation5 + $0x70] sm:$0xff]
        %v392 = vld [vmem:[#allocation5 + $0x78] sm:$0xff]
        %v393 = vld [vmem:[#allocation5 + $0x80] sm:$0xff]
        %v394 = vld [vmem:[#allocation5 + $0x88] sm:$0xff]
        %v395 = vld [vmem:[#allocation5 + $0x90] sm:$0xff]
        %v396 = vld [vmem:[#allocation5 + $0x98] sm:$0xff]
        %v397 = vld [vmem:[#allocation5 + $0xa0] sm:$0xff]
        %v398 = vld [vmem:[#allocation5 + $0xa8] sm:$0xff]
        %v399 = vld [vmem:[#allocation5 + $0xb0] sm:$0xff]
        %v400 = vld [vmem:[#allocation5 + $0xb8] sm:$0xff]
        %v401 = vld [vmem:[#allocation5 + $0xc0] sm:$0xff]
        %v402 = vld [vmem:[#allocation5 + $0xc8] sm:$0xff]
        %v403 = vld [vmem:[#allocation5 + $0xd0] sm:$0xff]
        %v404 = vld [vmem:[#allocation5 + $0xd8] sm:$0xff]
        %v405 = vld [vmem:[#allocation5 + $0xe0] sm:$0xff]
        %v406 = vld [vmem:[#allocation5 + $0xe8] sm:$0xff]
        %v407 = vld [vmem:[#allocation5 + $0xf0] sm:$0xff]
        %v408 = vld [vmem:[#allocation5 + $0xf8] sm:$0xff]
        %v409 = vld [vmem:[%s4] sm:$0xf]
        %v411 = vlaneseq
        %v412 = vshrl.u32 %v411, 7
        %v413 = vsub.s32 0, %v412
        %v414 = vrot.slane %v409, %v413
        %v415 = vlaneseq
        %v416 = vshrl.u32 %v415, 7
        %v417 = vsub.s32 1, %v416
        %v418 = vrot.slane %v409, %v417
        %v419 = vlaneseq
        %v420 = vshrl.u32 %v419, 7
        %v421 = vsub.s32 2, %v420
        %v422 = vrot.slane %v409, %v421
        %v423 = vlaneseq
        %v424 = vshrl.u32 %v423, 7
        %v425 = vsub.s32 3, %v424
        %v426 = vrot.slane %v409, %v425
        %v463 = vunpack.c.l.b16 %v377
        %v464 = vunpack.c.h.b16 %v377
        %v465 = vunpack.c.l.b16 %v378
        %v466 = vunpack.c.h.b16 %v378
        %v467 = vunpack.c.l.b16 %v379
        %v468 = vunpack.c.h.b16 %v379
        %v469 = vunpack.c.l.b16 %v380
        %v470 = vunpack.c.h.b16 %v380
        %v471 = vunpack.c.l.b16 %v381
        %v472 = vunpack.c.h.b16 %v381
        %v473 = vunpack.c.l.b16 %v382
        %v474 = vunpack.c.h.b16 %v382
        %v475 = vunpack.c.l.b16 %v383
        %v476 = vunpack.c.h.b16 %v383
        %v477 = vunpack.c.l.b16 %v384
        %v478 = vunpack.c.h.b16 %v384
        %v479 = vunpack.c.l.b16 %v385
        %v480 = vunpack.c.h.b16 %v385
        %v481 = vunpack.c.l.b16 %v386
        %v482 = vunpack.c.h.b16 %v386
        %v483 = vunpack.c.l.b16 %v387
        %v484 = vunpack.c.h.b16 %v387
        %v485 = vunpack.c.l.b16 %v388
        %v486 = vunpack.c.h.b16 %v388
        %v487 = vunpack.c.l.b16 %v389
        %v488 = vunpack.c.h.b16 %v389
        %v489 = vunpack.c.l.b16 %v390
        %v490 = vunpack.c.h.b16 %v390
        %v491 = vunpack.c.l.b16 %v391
        %v492 = vunpack.c.h.b16 %v391
        %v493 = vunpack.c.l.b16 %v392
        %v494 = vunpack.c.h.b16 %v392
        %v495 = vunpack.c.l.b16 %v393
        %v496 = vunpack.c.h.b16 %v393
        %v497 = vunpack.c.l.b16 %v394
        %v498 = vunpack.c.h.b16 %v394
        %v499 = vunpack.c.l.b16 %v395
        %v500 = vunpack.c.h.b16 %v395
        %v501 = vunpack.c.l.b16 %v396
        %v502 = vunpack.c.h.b16 %v396
        %v503 = vunpack.c.l.b16 %v397
        %v504 = vunpack.c.h.b16 %v397
        %v505 = vunpack.c.l.b16 %v398
        %v506 = vunpack.c.h.b16 %v398
        %v507 = vunpack.c.l.b16 %v399
        %v508 = vunpack.c.h.b16 %v399
        %v509 = vunpack.c.l.b16 %v400
        %v510 = vunpack.c.h.b16 %v400
        %v511 = vunpack.c.l.b16 %v401
        %v512 = vunpack.c.h.b16 %v401
        %v513 = vunpack.c.l.b16 %v402
        %v514 = vunpack.c.h.b16 %v402
        %v515 = vunpack.c.l.b16 %v403
        %v516 = vunpack.c.h.b16 %v403
        %v517 = vunpack.c.l.b16 %v404
        %v518 = vunpack.c.h.b16 %v404
        %v519 = vunpack.c.l.b16 %v405
        %v520 = vunpack.c.h.b16 %v405
        %v521 = vunpack.c.l.b16 %v406
        %v522 = vunpack.c.h.b16 %v406
        %v523 = vunpack.c.l.b16 %v407
        %v524 = vunpack.c.h.b16 %v407
        %v525 = vunpack.c.l.b16 %v408
        %v526 = vunpack.c.h.b16 %v408
        %v527 = vpack.c.b16 %v467, %v463
        %v528 = vpack.c.b16 %v468, %v464
        %v529 = vpack.c.b16 %v469, %v465
        %v530 = vpack.c.b16 %v470, %v466
        %v531 = vpack.c.b16 %v475, %v471
        %v532 = vpack.c.b16 %v476, %v472
        %v533 = vpack.c.b16 %v477, %v473
        %v534 = vpack.c.b16 %v478, %v474
        %v535 = vpack.c.b16 %v483, %v479
        %v536 = vpack.c.b16 %v484, %v480
        %v537 = vpack.c.b16 %v485, %v481
        %v538 = vpack.c.b16 %v486, %v482
        %v539 = vpack.c.b16 %v491, %v487
        %v540 = vpack.c.b16 %v492, %v488
        %v541 = vpack.c.b16 %v493, %v489
        %v542 = vpack.c.b16 %v494, %v490
        %v543 = vpack.c.b16 %v499, %v495
        %v544 = vpack.c.b16 %v500, %v496
        %v545 = vpack.c.b16 %v501, %v497
        %v546 = vpack.c.b16 %v502, %v498
        %v547 = vpack.c.b16 %v507, %v503
        %v548 = vpack.c.b16 %v508, %v504
        %v549 = vpack.c.b16 %v509, %v505
        %v550 = vpack.c.b16 %v510, %v506
        %v551 = vpack.c.b16 %v515, %v511
        %v552 = vpack.c.b16 %v516, %v512
        %v553 = vpack.c.b16 %v517, %v513
        %v554 = vpack.c.b16 %v518, %v514
        %v555 = vpack.c.b16 %v523, %v519
        %v556 = vpack.c.b16 %v524, %v520
        %v557 = vpack.c.b16 %v525, %v521
        %v558 = vpack.c.b16 %v526, %v522
        %591 = vmatprep.subr.bf16.mxu0 %v556
        %592 = vmatpush1.bf16.msra.mxu0 %v555
        %593 = vmatprep.subr.bf16.mxu0 %v552
        %594 = vmatpush1.bf16.msra.mxu0 %v551
        %595 = vmatprep.subr.bf16.mxu0 %v548
        %596 = vmatpush1.bf16.msra.mxu0 %v547
        %597 = vmatprep.subr.bf16.mxu0 %v544
        %598 = vmatpush1.bf16.msra.mxu0 %v543
        %599 = vmatprep.subr.bf16.mxu0 %v540
        %600 = vmatpush1.bf16.msra.mxu0 %v539
        %601 = vmatprep.subr.bf16.mxu0 %v536
        %602 = vmatpush1.bf16.msra.mxu0 %v535
        %603 = vmatprep.subr.bf16.mxu0 %v532
        %604 = vmatpush1.bf16.msra.mxu0 %v531
        %605 = vmatprep.subr.bf16.mxu0 %v528
        %606 = vmatpush1.bf16.msra.mxu0 %v527
        %607 = vmatprep.subr.bf16.mxu0 0
        %608 = vmatpush2.bf16.msra.mxu0 0
        %609 = vmatprep.subr.bf16.mxu0 0
        %610 = vmatpush2.bf16.msra.mxu0 0
        %611 = vmatprep.subr.bf16.mxu0 0
        %612 = vmatpush2.bf16.msra.mxu0 0
        %613 = vmatprep.subr.bf16.mxu0 0
        %614 = vmatpush2.bf16.msra.mxu0 0
        %615 = vmatprep.subr.bf16.mxu0 0
        %616 = vmatpush2.bf16.msra.mxu0 0
        %617 = vmatprep.subr.bf16.mxu0 0
        %618 = vmatpush2.bf16.msra.mxu0 0
        %619 = vmatprep.subr.bf16.mxu0 0
        %620 = vmatpush2.bf16.msra.mxu0 0
        %621 = vmatprep.subr.bf16.mxu0 0
        %622 = vmatpush2.bf16.msra.mxu0 0
        %623 = vmatprep.mubr.bf16.mxu0 0
        %624 = vmatmul.mubr.bf16.gmra.mxu0 %v376
        %v625 = vpop.f32.mrf.mxu0
        %v626 = vadd.f32 %v414, %v625
        %v627 = vpop.f32.mrf.mxu0
        %v628 = vadd.f32 %v418, %v627
        %v629 = vpop.f32.mrf.mxu0
        %v630 = vpop.f32.mrf.mxu0
        %631 = vdwg.mxu0
        %632 = vmatprep.subr.bf16.mxu0 %v558
        %633 = vmatpush1.bf16.msra.mxu0 %v557
        %634 = vmatprep.subr.bf16.mxu0 %v554
        %635 = vmatpush1.bf16.msra.mxu0 %v553
        %636 = vmatprep.subr.bf16.mxu0 %v550
        %637 = vmatpush1.bf16.msra.mxu0 %v549
        %638 = vmatprep.subr.bf16.mxu0 %v546
        %639 = vmatpush1.bf16.msra.mxu0 %v545
        %640 = vmatprep.subr.bf16.mxu0 %v542
        %641 = vmatpush1.bf16.msra.mxu0 %v541
        %642 = vmatprep.subr.bf16.mxu0 %v538
        %643 = vmatpush1.bf16.msra.mxu0 %v537
        %644 = vmatprep.subr.bf16.mxu0 %v534
        %645 = vmatpush1.bf16.msra.mxu0 %v533
        %646 = vmatprep.subr.bf16.mxu0 %v530
        %647 = vmatpush1.bf16.msra.mxu0 %v529
        %648 = vmatprep.subr.bf16.mxu0 0
        %649 = vmatpush2.bf16.msra.mxu0 0
        %650 = vmatprep.subr.bf16.mxu0 0
        %651 = vmatpush2.bf16.msra.mxu0 0
        %652 = vmatprep.subr.bf16.mxu0 0
        %653 = vmatpush2.bf16.msra.mxu0 0
        %654 = vmatprep.subr.bf16.mxu0 0
        %655 = vmatpush2.bf16.msra.mxu0 0
        %656 = vmatprep.subr.bf16.mxu0 0
        %657 = vmatpush2.bf16.msra.mxu0 0
        %658 = vmatprep.subr.bf16.mxu0 0
        %659 = vmatpush2.bf16.msra.mxu0 0
        %660 = vmatprep.subr.bf16.mxu0 0
        %661 = vmatpush2.bf16.msra.mxu0 0
        %662 = vmatprep.subr.bf16.mxu0 0
        %663 = vmatpush2.bf16.msra.mxu0 0
        %664 = vmatprep.mubr.bf16.mxu0 0
        %665 = vmatmul.mubr.bf16.gmra.mxu0 %v376
        %v666 = vpop.f32.mrf.mxu0
        %v667 = vadd.f32 %v422, %v666
        %v668 = vpop.f32.mrf.mxu0
        %v669 = vadd.f32 %v426, %v668
        %v670 = vpop.f32.mrf.mxu0
        %v671 = vpop.f32.mrf.mxu0
        %672 = vdwg.mxu0
        %673 = vst [vmem:[%s254] sm:$0xff] %v626
        %674 = vst [vmem:[%s254 + $0x8] sm:$0xff] %v628
        %675 = vst [vmem:[%s254 + $0x10] sm:$0xff] %v667
        %676 = vst [vmem:[%s254 + $0x18] sm:$0xff] %v669
        %s677 = sand.u32 %s141, 1
        %s678 = scalar_lea.sflag [#allocation4], %s677
        %s679 = sand.u32 %s141, 1
        %s680 = smul.addr %s679, 32
        %s681 = scalar_lea.vmem [#allocation7], %s680
        // Predicated region
        $region49: #{tpu_custom_call.1} parent=39 // pred_check
          %p682 = pneg %p151
        $region50: #{tpu_custom_call.1} parent=39 // pred_check_branch
          %684 = sbr.rel (%p682) target = $region52
        $region51: #{tpu_custom_call.1} parent=39 // pred_region
          %s686 = ssub.s32 512, 512
          %687 = vsyncadd %s678, %s686
          %s688 = smul.addr %s23, 4
          %s689 = smul.addr %s688, 128
          %s690 = scalar_lea.hbm %s5, %s689
          %s692 = sshll.u32 %s681, 4
          %s693 = int_to_ptr.vmem [resolvable:$true] %s692
          %695 = dma.vmem_to_hbm [thread:$0]  %s693, 512, %s690, %s678
        $region52: #{tpu_custom_call.1} parent=39 // pred_fallthru
          _
      $region40: #{tpu_custom_call.1} parent=5 // pred_fallthru
        _
      %p696 = scmp.le.s32.totalorder 2, %s18
      // Predicated region
      $region53: #{tpu_custom_call.1} parent=5 // pred_check
        %p697 = pneg %p696
      $region54: #{tpu_custom_call.1} parent=5 // pred_check_branch
        %699 = sbr.rel (%p697) target = $region56
      $region55: #{tpu_custom_call.1} parent=5 // pred_region
        %s700 = ssub.s32 %s18, 2
        // Predicated region
        $region57: #{tpu_custom_call.1} parent=55 // pred_check
          %p701 = pneg %p157
        $region58: #{tpu_custom_call.1} parent=55 // pred_check_branch
          %703 = sbr.rel (%p701) target = $region60
        $region59: #{tpu_custom_call.1} parent=55 // pred_region
          %s704 = sand.u32 %s142, 1
          %s705 = scalar_lea.sflag [#allocation4], %s704
          %s706 = sand.u32 %s142, 1
          %s707 = smul.addr %s706, 32
          %s708 = scalar_lea.vmem [#allocation7], %s707
          %709 = dma.done %s705, 512
        $region60: #{tpu_custom_call.1} parent=55 // pred_fallthru
          _
      $region56: #{tpu_custom_call.1} parent=5 // pred_fallthru
        _
    $region6: #{tpu_custom_call.1} parent=1 // loop_footer
      %s22 = sadd.s32 1, %s18
    $region7: #{tpu_custom_call.1} parent=1 // loop_footer_branch
      %17 = sbr.rel target = $region3
    $region8: #{tpu_custom_call.1} parent=1 // loop_exit
      _
    %710 = vsyncpa [#allocation3], 1
    %s711 = scalar_lea.sflag [#allocation3], 1
    %712 = vsyncpa %s711, 1
    %713 = vsyncpa [#allocation6], 1
    %714 = vsyncpa [#allocation4], 1
    %s715 = scalar_lea.sflag [#allocation4], 1
    %716 = vsyncpa %s715, 1

</llo_original>
